<compile_context>
chip_gen: v7x
topology: tpu7x:2x2x1
jax: 0.10.0
libtpu: 0.0.40
codegen_flags: <defaults>
</compile_context>

<pallas_src>
import functools
import math

import jax
import jax.numpy as jnp
from jax.experimental import pallas as pl
from jax.experimental.pallas import tpu as pltpu


_LANES = 128
_MAX_BLOCK_ROWS = 8192       # (8192, 128) f32 = 4 MiB single VMEM buffer
_NSEM = 4                    # DMA copies kept in flight
_PALLAS_MIN_ELEMS = 16384    # below this a fused XLA fill beats any kernel launch


def _activate(variance, act: str):
    """Scalar activation f(variance), matching the PyTorch module."""
    v = jnp.asarray(variance, jnp.float32)
    if act == "exp":
        return jnp.exp(v * 10.0)
    if act == "linear":
        return v * 10.0
    if act == "square":
        return (v * 10.0) ** 2
    if act == "identity":      # used by warp(): fill with the raw scalar
        return v
    raise NotImplementedError(act)


def _fill_fanout_kernel(val_ref, o_ref, buf, sem, *,
                        n_full: int, tail_rows: int, block_rows: int, nsem: int):
    """Fill one constant VMEM block once, then DMA fan-out to the HBM output.

    o_ref is the raw HBM output (memory_space=pl.ANY).  The kernel writes it
    purely with async copies from the single constant buffer, keeping up to
    `nsem` copies in flight.  All slot bookkeeping is static Python.
    """
    # One-time fill of the constant block (direct broadcast, no ones*mul).
    buf[...] = jnp.full(buf.shape, val_ref[0], buf.dtype)

    def full_copy(start, slot):
        return pltpu.make_async_copy(
            buf, o_ref.at[pl.ds(start, block_rows)], sem.at[slot])

    if n_full <= nsem:
        # Common case: every full block gets its own semaphore slot, no reuse.
        for i in range(n_full):                       # static unroll
            full_copy(i * block_rows, i).start()
    else:
        @pl.loop(0, n_full)
        def _(i):
            slot = i % nsem
            # Reuse slot: wait for the copy issued `nsem` steps ago.
            @pl.when(i >= nsem)
            def _():
                full_copy(0, slot).wait()
            start = pl.multiple_of(i * block_rows, block_rows)
            full_copy(start, slot).start()

    tail_slot = n_full % nsem
    if tail_rows > 0:
        if n_full >= nsem:                            # slot may still be in flight
            full_copy(0, tail_slot).wait()
        pltpu.make_async_copy(
            buf.at[pl.ds(0, tail_rows)],
            o_ref.at[pl.ds(n_full * block_rows, tail_rows)],
            sem.at[tail_slot],
        ).start()

    # Drain every outstanding copy (slot sets are static Python ints).
    outstanding = {(n_full - k) % nsem for k in range(1, min(n_full, nsem) + 1)}
    if tail_rows > 0:
        outstanding.discard(tail_slot)                # waited above if it was live
    for s in sorted(outstanding):
        full_copy(0, s).wait()
    if tail_rows > 0:
        pltpu.make_async_copy(
            buf.at[pl.ds(0, tail_rows)],
            o_ref.at[pl.ds(0, tail_rows)],
            sem.at[tail_slot],
        ).wait()


def single_variance_forward(x: jax.Array, variance, act: str = "exp",
                            *, force_pallas: bool = False) -> jax.Array:
    """Pallas equivalent of SingleVarianceNetwork.forward.

    Returns an array of shape (*x.shape[:-1], 1), dtype float32.
    """
    out_shape = (*x.shape[:-1], 1)
    p = math.prod(out_shape)
    fill_val = _activate(variance, act)               # 0-d scalar, O(1) XLA op

    exact = (p % _LANES == 0)
    if (p < _PALLAS_MIN_ELEMS or not exact) and not force_pallas:
        # Tiny or non-lane-aligned outputs: a fused XLA fill is already at the
        # HBM-write roofline with zero kernel-launch overhead.
        return jnp.full(out_shape, fill_val, jnp.float32)

    rows = pl.cdiv(p, _LANES)                         # lane-dense slab rows
    block_rows = min(rows, _MAX_BLOCK_ROWS)
    n_full = rows // block_rows
    tail_rows = rows - n_full * block_rows

    kernel = functools.partial(
        _fill_fanout_kernel, n_full=n_full, tail_rows=tail_rows,
        block_rows=block_rows, nsem=_NSEM)

    slab = pl.pallas_call(
        kernel,
        out_shape=jax.ShapeDtypeStruct((rows, _LANES), jnp.float32),
        in_specs=[pl.BlockSpec(memory_space=pltpu.MemorySpace.SMEM)],  # scalar
        out_specs=pl.BlockSpec(memory_space=pl.ANY),                   # raw HBM
        scratch_shapes=[
            pltpu.VMEM((block_rows, _LANES), jnp.float32),
            pltpu.SemaphoreType.DMA((_NSEM,)),
        ],
    )(jnp.asarray(fill_val, jnp.float32).reshape((1,)))

    if exact:
        # rows * 128 == p: pure metadata reshape, no extra HBM pass.
        return slab.reshape(out_shape)
    # Padded fallback (only reachable with force_pallas on non-aligned p):
    # incurs one extra slice pass, which is why the default path uses jnp.full.
    return slab.reshape(-1)[:p].reshape(out_shape)


class SingleVarianceNetworkPallas:
    """Thin wrapper mirroring the PyTorch module's interface."""

    def __init__(self, init_val: float, activation: str = "exp"):
        if activation not in ("exp", "linear", "square"):
            raise NotImplementedError(activation)
        self.act = activation
        self.variance = jnp.asarray(init_val, dtype=jnp.float32)

    def __call__(self, x: jax.Array, *, force_pallas: bool = False) -> jax.Array:
        return single_variance_forward(x, self.variance, self.act,
                                       force_pallas=force_pallas)

    def warp(self, x: jax.Array, inv_s, *, force_pallas: bool = False) -> jax.Array:
        # ones([...,1]) * inv_s : direct fill, no post-kernel scale.
        return single_variance_forward(x, jnp.asarray(inv_s, jnp.float32),
                                       "identity", force_pallas=force_pallas)


if __name__ == "__main__":
    key = jax.random.PRNGKey(0)
    # Small input consistent with the module's usage: arbitrary leading dims, feature last.
    x = jax.random.normal(key, (2, 4, 16, 16), dtype=jnp.float32)
    init_val = 0.3

    refs = {
        "exp": float(jnp.exp(jnp.float32(init_val) * 10.0)),
        "linear": float(jnp.float32(init_val) * 10.0),
        "square": float((jnp.float32(init_val) * 10.0) ** 2),
    }

    for act, rv in refs.items():
        net = SingleVarianceNetworkPallas(init_val, activation=act)
        # Exercise the Pallas kernel itself (exact lane-dense slab, single DMA).
        out = jax.block_until_ready(net(x, force_pallas=True))
        assert out.shape == (2, 4, 16, 1), out.shape
        assert out.dtype == jnp.float32
        ref = jnp.full((2, 4, 16, 1), rv, jnp.float32)
        assert jnp.allclose(out, ref, rtol=1e-6, atol=1e-6), act
        # Tiny-output fast path (fused XLA fill) agrees with the kernel path.
        out_fast = jax.block_until_ready(net(x))
        assert jnp.allclose(out_fast, out, rtol=1e-6, atol=1e-6), act

    # warp(): fills with inv_s directly.
    net = SingleVarianceNetworkPallas(init_val, activation="exp")
    w = jax.block_until_ready(net.warp(x, 2.5, force_pallas=True))
    assert w.shape == (2, 4, 16, 1)
    assert jnp.allclose(w, jnp.full((2, 4, 16, 1), 2.5, jnp.float32),
                        rtol=1e-6, atol=1e-6)

    # Non-128-aligned P exercises the padded fallback (only used under force_pallas).
    x_odd = jnp.zeros((5, 5, 3), dtype=jnp.float32)
    w_odd = jax.block_until_ready(net(x_odd, force_pallas=True))
    assert w_odd.shape == (5, 5, 1)
    assert jnp.allclose(w_odd, refs["exp"], rtol=1e-6, atol=1e-6)

    # Larger P (NeuS-style n_rays * n_samples): exact slab, multi-block DMA
    # fan-out with semaphore-ring reuse (n_full=6 > NSEM) plus a tail block.
    x_big = jnp.zeros((385, 128, 128, 3), dtype=jnp.float32)   # P = 6,307,840
    out_big = jax.block_until_ready(net(x_big))
    assert out_big.shape == (385, 128, 128, 1)
    assert jnp.allclose(out_big.min(), refs["exp"], rtol=1e-6, atol=1e-6)
    assert jnp.allclose(out_big.max(), refs["exp"], rtol=1e-6, atol=1e-6)

    print("KERNEL_OK")
</pallas_src>

<mosaic_0001>
module attributes {stable_mosaic.version = 11 : i64} {
  func.func @_fill_fanout_kernel(%arg0: memref<1xf32, #tpu.memory_space<smem>>, %arg1: memref<1x128xf32, #tpu.memory_space<any>>, %arg2: memref<1x128xf32, #tpu.memory_space<vmem>>, %arg3: memref<4x!tpu.dma_semaphore, #tpu.memory_space<semaphore_mem>>) attributes {dimension_semantics = [], scalar_prefetch = 0 : i64, scratch_operands = 2 : i64, tpu.core_type = #tpu.core_type<tc>} {
    %c0 = arith.constant 0 : index
    %0 = memref.load %arg0[%c0] : memref<1xf32, #tpu.memory_space<smem>>
    %1 = vector.broadcast %0 : f32 to vector<1x128xf32>
    %c0_0 = arith.constant 0 : index
    %c0_1 = arith.constant 0 : index
    %2 = vector.load %arg2[%c0_0, %c0_1] : memref<1x128xf32, #tpu.memory_space<vmem>>, vector<1x128xf32>
    tpu.vector_store %arg2[%c0_0, %c0_1], %1 {strides = array<i32>} : memref<1x128xf32, #tpu.memory_space<vmem>>, vector<1x128xf32>,
    %c0_i32 = arith.constant 0 : i32
    %c0_i32_2 = arith.constant 0 : i32
    %c0_i32_3 = arith.constant 0 : i32
    %3 = tpu.memref_slice %arg1[%c0_i32_2, %c0_i32_3] : memref<1x128xf32, #tpu.memory_space<any>> -> memref<1x128xf32, #tpu.memory_space<any>>
    %4 = tpu.memref_slice %arg3[%c0_i32] : memref<4x!tpu.dma_semaphore, #tpu.memory_space<semaphore_mem>> -> memref<1x!tpu.dma_semaphore, #tpu.memory_space<semaphore_mem>>
    %5 = tpu.memref_squeeze %4 : memref<1x!tpu.dma_semaphore, #tpu.memory_space<semaphore_mem>> -> memref<!tpu.dma_semaphore, #tpu.memory_space<semaphore_mem>>
    tpu.enqueue_dma source(%arg2 : memref<1x128xf32, #tpu.memory_space<vmem>>) target(%3 : memref<1x128xf32, #tpu.memory_space<any>>) target_semaphore(%5 : memref<!tpu.dma_semaphore, #tpu.memory_space<semaphore_mem>>)
    %c0_i32_4 = arith.constant 0 : i32
    %c0_i32_5 = arith.constant 0 : i32
    %c0_i32_6 = arith.constant 0 : i32
    %6 = tpu.memref_slice %arg1[%c0_i32_5, %c0_i32_6] : memref<1x128xf32, #tpu.memory_space<any>> -> memref<1x128xf32, #tpu.memory_space<any>>
    %7 = tpu.memref_slice %arg3[%c0_i32_4] : memref<4x!tpu.dma_semaphore, #tpu.memory_space<semaphore_mem>> -> memref<1x!tpu.dma_semaphore, #tpu.memory_space<semaphore_mem>>
    %8 = tpu.memref_squeeze %7 : memref<1x!tpu.dma_semaphore, #tpu.memory_space<semaphore_mem>> -> memref<!tpu.dma_semaphore, #tpu.memory_space<semaphore_mem>>
    tpu.wait_dma2 semaphore(%8 : memref<!tpu.dma_semaphore, #tpu.memory_space<semaphore_mem>>) src(%arg2 : memref<1x128xf32, #tpu.memory_space<vmem>>) dst(%6 : memref<1x128xf32, #tpu.memory_space<any>>)
    return
  }
}

</mosaic_0001>

<llo_original>
// kernel: tpu_custom_call.1
$region0: #{tpu_custom_call.1}
  #allocation0 [shape = 'u32[]', space=smem, size = 0x4, offset = 0x4, fixed_abs, tag = 'smem constant byte address 0x4 - core index']
  #allocation1 [shape = 'u32[144,128]{1,0:T(1,128)}', space=vmem, size = 0x12000, scoped, tag = 'internal scratch']
  #allocation2 [shape = 'f32[1,128]{1,0:T(1,128)}', space=vmem, size = 0x200, scoped, tag = 'scratch operand']
  #allocation3 [shape = 's32[4]{0}', space=sflag, size = 0x10, scoped, tag = 'scratch operand']
  #allocation4 [shape = 'f32[1]{0:T(128)S(6)}', space=smem, size = 0x200, scoped, tag = 'scoped memory for tpu_custom_call.1']
  #allocation5 [shape = 's32[]', space=sflag, size = 0x4, offset = 0, fixed_abs, tag = 'sflag constant byte address 0x0 - dummy sync flag']
  #allocation6 [shape = 's32[]', space=sflag, size = 0x4, offset = 0, fixed_abs, tag = 'sflag constant byte address 0x0 - dummy sync flag']
  #allocation7 [shape = 'u32[]', space=smem, size = 0x4, offset = 0x44, fixed_abs, tag = 'smem constant byte address 0x44 - assertion arg 0']
  #allocation8 [shape = 'u32[]', space=smem, size = 0x4, offset = 0x48, fixed_abs, tag = 'smem constant byte address 0x48 - assertion arg 1']
  %s0 = inlined_call_operand.<no memory space> [shape: f32[1], index: 0, kind: input, shape index: {}]
  %s1 = inlined_call_operand.hbm [shape: f32[1,128], index: 1, kind: output, shape index: {}]
  %s2 = sld [smem:[#allocation0]]
  $region10: #{tpu_custom_call.1} parent=0
    _
  %s4 = ssub.s32 1, %s2
  %s5 = scalar_select 0, %s4, %s2
  %6 = sst [smem:[#allocation4]] %s0
  // Predicated region
  $region2: #{tpu_custom_call.1} parent=0 // pred_check
    _
  $region3: #{tpu_custom_call.1} parent=0 // pred_check_branch
    %8 = sbr.rel (0) target = $region5
  $region4: #{tpu_custom_call.1} parent=0 // pred_region
    _
  $region5: #{tpu_custom_call.1} parent=0 // pred_fallthru
    _
  %s9 = sld [smem:[#allocation4]]
  %v10 = vstv %s9
  %11 = vst [vmem:[#allocation2] sm:$0x1] %v10
  // Predicated region
  $region6: #{tpu_custom_call.1} parent=0 // pred_check
    _
  $region7: #{tpu_custom_call.1} parent=0 // pred_check_branch
    %13 = sbr.rel target = $region9
  $region8: #{tpu_custom_call.1} parent=0 // pred_region
    %14 = sst [smem:[#allocation7]] [#allocation6]
    %15 = sst [smem:[#allocation8]] [#allocation5]
  $region9: #{tpu_custom_call.1} parent=0 // pred_fallthru
    _
  %17 = shalt.err (0)
  %s19 = sshll.u32 [#allocation2], 4
  %s20 = int_to_ptr.vmem [resolvable:$true] %s19
  %22 = dma.vmem_to_hbm [thread:$0]  %s20, 16, %s1, [#allocation3]
  %s23 = smul.u32 1, 1
  %s24 = sshll.u32 %s23, 4
  %25 = dma.done [#allocation3], %s24
  %26 = vsyncmov [#allocation3]
  %s27 = vpop.sfrf %26
  %p28 = scmp.eq.s32.totalorder %s27, 0
  %p29 = pneg %p28
  %31 = shalt.err (%p29)
  %s32 = scalar_lea.sflag [#allocation3], 1
  %33 = vsyncmov %s32
  %s34 = vpop.sfrf %33
  %p35 = scmp.eq.s32.totalorder %s34, 0
  %p36 = pneg %p35
  %38 = shalt.err (%p36)
  %s39 = scalar_lea.sflag [#allocation3], 2
  %40 = vsyncmov %s39
  %s41 = vpop.sfrf %40
  %p42 = scmp.eq.s32.totalorder %s41, 0
  %p43 = pneg %p42
  %45 = shalt.err (%p43)
  %s46 = scalar_lea.sflag [#allocation3], 3
  %47 = vsyncmov %s46
  %s48 = vpop.sfrf %47
  %p49 = scmp.eq.s32.totalorder %s48, 0
  %p50 = pneg %p49
  %52 = shalt.err (%p50)

</llo_original>
